<compile_context>
chip_gen: v7x
topology: tpu7x:2x2x1
jax: 0.10.0
libtpu: 0.0.40
codegen_flags: <defaults>
</compile_context>

<pallas_src>
import jax
import jax.numpy as jnp
from jax.experimental import pallas as pl
from jax.experimental.pallas import tpu as pltpu


def _sigmoid(x):
    # EUP-friendly sigmoid: native tanh, no f32 divide on the VALU.
    return 0.5 * (jnp.tanh(0.5 * x) + 1.0)


def mlp_kernel(params_ref, x_ref, o_ref):
    # params_ref: SMEM f32[9] = [w00, w01, w10, w11, b10, b11, v0, v1, bo]
    #   (w stored as (in, out); h_j = sum_i x_i * w[i, j] + b_j)
    # x_ref: VMEM (2, tile_r, 128) block -- batch dense over sublanes and lanes.
    # o_ref: VMEM (tile_r, 128) block -- dense output tile.
    x0 = x_ref[0]                      # (tile_r, 128)
    x1 = x_ref[1]                      # (tile_r, 128)

    dt = x0.dtype
    w00 = params_ref[0].astype(dt)
    w01 = params_ref[1].astype(dt)
    w10 = params_ref[2].astype(dt)
    w11 = params_ref[3].astype(dt)
    b10 = params_ref[4].astype(dt)
    b11 = params_ref[5].astype(dt)
    v0 = params_ref[6].astype(dt)
    v1 = params_ref[7].astype(dt)
    bo = params_ref[8].astype(dt)

    # fc1 + sigmoid, unrolled as VPU FMAs broadcast over the dense batch tile.
    h0 = _sigmoid(x0 * w00 + x1 * w10 + b10)
    h1 = _sigmoid(x0 * w01 + x1 * w11 + b11)
    # fc2 + sigmoid.
    y = _sigmoid(h0 * v0 + h1 * v1 + bo)
    o_ref[...] = y.astype(o_ref.dtype)


def net_forward(x, w1, b1, w2, b2, *, tile_r=2048, compute_dtype=jnp.float32):
    """x: (B, 2).  w1: (2, 2), b1: (1, 2), w2: (2, 1), b2: (1, 1) -- all (in, out).
    Returns (B, 1) f32, same semantics as the PyTorch Net.forward.

    tile_r rows of 128 samples per grid step (multiple of 8). Default 2048 ->
    2 MiB in + 1 MiB out per step; safe on v5e/v6e/v7x default VMEM limits.
    """
    B = x.shape[0]

    # Pack the 9 parameters into one flat f32 array for SMEM.
    params = jnp.concatenate(
        [w1.reshape(-1), b1.reshape(-1), w2.reshape(-1), b2.reshape(-1)]
    ).astype(jnp.float32)

    # Batch -> (rows, 128 lanes); rows padded to a multiple of tile_r (itself a
    # multiple of 8 so every tile is sublane-dense).
    R = pl.cdiv(B, 128)
    tile_r = max(8, min(int(tile_r), ((R + 7) // 8) * 8))
    n_blk = pl.cdiv(R, tile_r)
    Rp = n_blk * tile_r
    Bp = Rp * 128

    xT = x.astype(compute_dtype).T                     # (2, B)
    if Bp != B:
        xT = jnp.pad(xT, ((0, 0), (0, Bp - B)))        # padded lanes sliced off below
    x3 = xT.reshape(2, Rp, 128)                        # feature-major, batch dense

    out = pl.pallas_call(
        mlp_kernel,
        out_shape=jax.ShapeDtypeStruct((Rp, 128), compute_dtype),
        grid=(n_blk,),
        in_specs=[
            pl.BlockSpec(memory_space=pltpu.MemorySpace.SMEM),   # 9 scalars, no DMA tile
            pl.BlockSpec((2, tile_r, 128), lambda i: (0, i, 0)),  # MiB-scale dense block
        ],
        out_specs=pl.BlockSpec((tile_r, 128), lambda i: (i, 0)),
        compiler_params=pltpu.CompilerParams(
            dimension_semantics=("parallel",),
        ),
    )(params, x3)

    return out.reshape(Bp)[:B].reshape(B, 1).astype(jnp.float32)


def init_params(key):
    """Deterministic init mirroring nn.Linear shapes: fc1 (2->2), fc2 (2->1).
    Weights stored as (in, out) so the forward math is x @ W + b."""
    k1, k2, k3, k4 = jax.random.split(key, 4)
    bound = 1.0 / jnp.sqrt(2.0)   # nn.Linear default: U(-1/sqrt(fan_in), 1/sqrt(fan_in))
    w1 = jax.random.uniform(k1, (2, 2), jnp.float32, -bound, bound)
    b1 = jax.random.uniform(k2, (1, 2), jnp.float32, -bound, bound)
    w2 = jax.random.uniform(k3, (2, 1), jnp.float32, -bound, bound)
    b2 = jax.random.uniform(k4, (1, 1), jnp.float32, -bound, bound)
    return w1, b1, w2, b2


if __name__ == "__main__":
    key = jax.random.PRNGKey(0)
    k_x, k_p = jax.random.split(key)

    B = 8  # small demo batch (kernel pays off for B in the tens of thousands)
    x = jax.random.normal(k_x, (B, 2), jnp.float32)
    w1, b1, w2, b2 = init_params(k_p)

    out = net_forward(x, w1, b1, w2, b2)
    out = jax.block_until_ready(out)

    # Reference in plain JAX (same math as the PyTorch module).
    ref = jax.nn.sigmoid(jax.nn.sigmoid(x @ w1 + b1) @ w2 + b2)
    assert out.shape == (B, 1)
    assert jnp.allclose(out, ref, atol=1e-5), "mismatch vs reference"

    print("KERNEL_OK")
</pallas_src>

<mosaic_0001>
module attributes {stable_mosaic.version = 11 : i64} {
  func.func @mlp_kernel(%arg0: i32, %arg1: memref<9xf32, #tpu.memory_space<smem>>, %arg2: memref<2x8x128xf32, #tpu.memory_space<vmem>>, %arg3: memref<8x128xf32, #tpu.memory_space<vmem>>) attributes {dimension_semantics = [#tpu.dimension_semantics<parallel>], iteration_bounds = array<i64: 1>, scalar_prefetch = 0 : i64, scratch_operands = 0 : i64, tpu.core_type = #tpu.core_type<tc>, window_params = [{transform_indices = @transform_0, window_bounds = array<i64: 9>}, {transform_indices = @transform_1, window_bounds = array<i64: 2, 8, 128>}, {transform_indices = @transform_2, window_bounds = array<i64: 8, 128>}]} {
    %c0 = arith.constant 0 : index
    %c0_0 = arith.constant 0 : index
    %c0_1 = arith.constant 0 : index
    %0 = vector.load %arg2[%c0, %c0_0, %c0_1] : memref<2x8x128xf32, #tpu.memory_space<vmem>>, vector<1x8x128xf32>
    %1 = vector.shape_cast %0 : vector<1x8x128xf32> to vector<8x128xf32>
    %c1 = arith.constant 1 : index
    %c0_2 = arith.constant 0 : index
    %c0_3 = arith.constant 0 : index
    %2 = vector.load %arg2[%c1, %c0_2, %c0_3] : memref<2x8x128xf32, #tpu.memory_space<vmem>>, vector<1x8x128xf32>
    %3 = vector.shape_cast %2 : vector<1x8x128xf32> to vector<8x128xf32>
    %c0_4 = arith.constant 0 : index
    %4 = memref.load %arg1[%c0_4] : memref<9xf32, #tpu.memory_space<smem>>
    %c1_5 = arith.constant 1 : index
    %5 = memref.load %arg1[%c1_5] : memref<9xf32, #tpu.memory_space<smem>>
    %c2 = arith.constant 2 : index
    %6 = memref.load %arg1[%c2] : memref<9xf32, #tpu.memory_space<smem>>
    %c3 = arith.constant 3 : index
    %7 = memref.load %arg1[%c3] : memref<9xf32, #tpu.memory_space<smem>>
    %c4 = arith.constant 4 : index
    %8 = memref.load %arg1[%c4] : memref<9xf32, #tpu.memory_space<smem>>
    %c5 = arith.constant 5 : index
    %9 = memref.load %arg1[%c5] : memref<9xf32, #tpu.memory_space<smem>>
    %c6 = arith.constant 6 : index
    %10 = memref.load %arg1[%c6] : memref<9xf32, #tpu.memory_space<smem>>
    %c7 = arith.constant 7 : index
    %11 = memref.load %arg1[%c7] : memref<9xf32, #tpu.memory_space<smem>>
    %c8 = arith.constant 8 : index
    %12 = memref.load %arg1[%c8] : memref<9xf32, #tpu.memory_space<smem>>
    %13 = vector.broadcast %4 : f32 to vector<8x128xf32>
    %14 = arith.mulf %1, %13 : vector<8x128xf32>
    %15 = vector.broadcast %6 : f32 to vector<8x128xf32>
    %16 = arith.mulf %3, %15 : vector<8x128xf32>
    %17 = arith.addf %14, %16 : vector<8x128xf32>
    %18 = vector.broadcast %8 : f32 to vector<8x128xf32>
    %19 = arith.addf %17, %18 : vector<8x128xf32>
    %cst = arith.constant 5.000000e-01 : f32
    %20 = vector.broadcast %cst : f32 to vector<8x128xf32>
    %21 = arith.mulf %20, %19 : vector<8x128xf32>
    %22 = math.tanh %21 : vector<8x128xf32>
    %cst_6 = arith.constant 1.000000e+00 : f32
    %23 = vector.broadcast %cst_6 : f32 to vector<8x128xf32>
    %24 = arith.addf %22, %23 : vector<8x128xf32>
    %cst_7 = arith.constant 5.000000e-01 : f32
    %25 = vector.broadcast %cst_7 : f32 to vector<8x128xf32>
    %26 = arith.mulf %25, %24 : vector<8x128xf32>
    %27 = vector.broadcast %5 : f32 to vector<8x128xf32>
    %28 = arith.mulf %1, %27 : vector<8x128xf32>
    %29 = vector.broadcast %7 : f32 to vector<8x128xf32>
    %30 = arith.mulf %3, %29 : vector<8x128xf32>
    %31 = arith.addf %28, %30 : vector<8x128xf32>
    %32 = vector.broadcast %9 : f32 to vector<8x128xf32>
    %33 = arith.addf %31, %32 : vector<8x128xf32>
    %cst_8 = arith.constant 5.000000e-01 : f32
    %34 = vector.broadcast %cst_8 : f32 to vector<8x128xf32>
    %35 = arith.mulf %34, %33 : vector<8x128xf32>
    %36 = math.tanh %35 : vector<8x128xf32>
    %cst_9 = arith.constant 1.000000e+00 : f32
    %37 = vector.broadcast %cst_9 : f32 to vector<8x128xf32>
    %38 = arith.addf %36, %37 : vector<8x128xf32>
    %cst_10 = arith.constant 5.000000e-01 : f32
    %39 = vector.broadcast %cst_10 : f32 to vector<8x128xf32>
    %40 = arith.mulf %39, %38 : vector<8x128xf32>
    %41 = vector.broadcast %10 : f32 to vector<8x128xf32>
    %42 = arith.mulf %26, %41 : vector<8x128xf32>
    %43 = vector.broadcast %11 : f32 to vector<8x128xf32>
    %44 = arith.mulf %40, %43 : vector<8x128xf32>
    %45 = arith.addf %42, %44 : vector<8x128xf32>
    %46 = vector.broadcast %12 : f32 to vector<8x128xf32>
    %47 = arith.addf %45, %46 : vector<8x128xf32>
    %cst_11 = arith.constant 5.000000e-01 : f32
    %48 = vector.broadcast %cst_11 : f32 to vector<8x128xf32>
    %49 = arith.mulf %48, %47 : vector<8x128xf32>
    %50 = math.tanh %49 : vector<8x128xf32>
    %cst_12 = arith.constant 1.000000e+00 : f32
    %51 = vector.broadcast %cst_12 : f32 to vector<8x128xf32>
    %52 = arith.addf %50, %51 : vector<8x128xf32>
    %cst_13 = arith.constant 5.000000e-01 : f32
    %53 = vector.broadcast %cst_13 : f32 to vector<8x128xf32>
    %54 = arith.mulf %53, %52 : vector<8x128xf32>
    %c0_14 = arith.constant 0 : index
    %c0_15 = arith.constant 0 : index
    %55 = vector.load %arg3[%c0_14, %c0_15] : memref<8x128xf32, #tpu.memory_space<vmem>>, vector<8x128xf32>
    tpu.vector_store %arg3[%c0_14, %c0_15], %54 {strides = array<i32>} : memref<8x128xf32, #tpu.memory_space<vmem>>, vector<8x128xf32>,
    return
  }
  func.func @transform_0(%arg0: i32) -> i32 {
    %c0_i32 = arith.constant 0 : i32
    %c0_i32_0 = arith.constant 0 : i32
    return %c0_i32 : i32
  }
  func.func @transform_1(%arg0: i32) -> (i32, i32, i32) {
    %c0_i32 = arith.constant 0 : i32
    %c0_i32_0 = arith.constant 0 : i32
    %c0_i32_1 = arith.constant 0 : i32
    return %c0_i32, %arg0, %c0_i32_0 : i32, i32, i32
  }
  func.func @transform_2(%arg0: i32) -> (i32, i32) {
    %c0_i32 = arith.constant 0 : i32
    %c0_i32_0 = arith.constant 0 : i32
    return %arg0, %c0_i32 : i32, i32
  }
}

</mosaic_0001>

<llo_original>
// kernel: tpu_custom_call.1
$region0: #{tpu_custom_call.1}
  #allocation0 [shape = 'u32[]', space=smem, size = 0x4, offset = 0x4, fixed_abs, tag = 'smem constant byte address 0x4 - core index']
  #allocation1 [shape = 'u32[144,128]{1,0:T(1,128)}', space=vmem, size = 0x12000, scoped, tag = 'internal scratch']
  %s0 = inlined_call_operand.hbm [shape: f32[9], index: 0, kind: input, shape index: {}]
  %s1 = inlined_call_operand.hbm [shape: f32[2,8,128], index: 1, kind: input, shape index: {}]
  %s2 = inlined_call_operand.hbm [shape: f32[8,128], index: 2, kind: output, shape index: {}]
  %s3 = sld [smem:[#allocation0]]
  $region26: #{tpu_custom_call.1} parent=0
    _
  %s5 = ssub.s32 1, %s3
  %s6 = scalar_select 0, %s5, %s3
  $region1: #{tpu_custom_call.1} parent=0
    #allocation2 [shape = 'u8[512]{0}', space=smem, size = 0x200, scoped, tag = 'input window, operand 0, single buffered']
    #allocation3 [shape = 's32[1]{0}', space=sflag, size = 0x4, scoped, tag = 'scoped memory for tpu_custom_call.1']
    #allocation4 [shape = 's32[1]{0}', space=sflag, size = 0x4, scoped, tag = 'scoped memory for tpu_custom_call.1']
    #allocation5 [shape = 's32[1]{0}', space=sflag, size = 0x4, scoped, tag = 'scoped memory for tpu_custom_call.1']
    #allocation6 [shape = 'u8[8192]{0}', space=vmem, size = 0x2000, scoped, tag = 'input window, operand 1, single buffered']
    #allocation7 [shape = 'u8[4096]{0}', space=vmem, size = 0x1000, scoped, tag = 'output window, operand 0, single buffered']
    %7 = vsyncpa [#allocation5], 0
    %8 = vsyncpa [#allocation3], 0
    %9 = vsyncpa [#allocation4], 0
    // Predicated region
    $region2: #{tpu_custom_call.1} parent=1 // pred_check
      _
    $region3: #{tpu_custom_call.1} parent=1 // pred_check_branch
      %11 = sbr.rel (0) target = $region5
    $region4: #{tpu_custom_call.1} parent=1 // pred_region
      %s13 = ssub.s32 16, 16
      %14 = vsyncadd [#allocation5], %s13
      %17 = dma.hbm_to_smem %s0, 16, [#allocation2], [#allocation5]
    $region5: #{tpu_custom_call.1} parent=1 // pred_fallthru
      _
    // Predicated region
    $region6: #{tpu_custom_call.1} parent=1 // pred_check
      _
    $region7: #{tpu_custom_call.1} parent=1 // pred_check_branch
      %19 = sbr.rel (0) target = $region9
    $region8: #{tpu_custom_call.1} parent=1 // pred_region
      %s21 = ssub.s32 256, 256
      %22 = vsyncadd [#allocation3], %s21
      %s23 = sshll.u32 [#allocation6], 4
      %s24 = int_to_ptr.vmem [resolvable:$true] %s23
      %29 = dma.hbm_to_vmem [thread:$0]  %s1, 256, %s24, [#allocation3], 128, 128, 8
    $region9: #{tpu_custom_call.1} parent=1 // pred_fallthru
      _
    // Predicated region
    $region10: #{tpu_custom_call.1} parent=1 // pred_check
      _
    $region11: #{tpu_custom_call.1} parent=1 // pred_check_branch
      %31 = sbr.rel (0) target = $region13
    $region12: #{tpu_custom_call.1} parent=1 // pred_region
      %32 = dma.done [#allocation5], 16
    $region13: #{tpu_custom_call.1} parent=1 // pred_fallthru
      _
    // Predicated region
    $region14: #{tpu_custom_call.1} parent=1 // pred_check
      _
    $region15: #{tpu_custom_call.1} parent=1 // pred_check_branch
      %34 = sbr.rel (0) target = $region17
    $region16: #{tpu_custom_call.1} parent=1 // pred_region
      %35 = dma.done [#allocation3], 256
    $region17: #{tpu_custom_call.1} parent=1 // pred_fallthru
      _
    %36 = sfence
    %v37 = vld [vmem:[#allocation6] sm:$0xff]
    %s38 = scalar_lea.vmem [#allocation6], 8
    %v39 = vld [vmem:[%s38] sm:$0xff]
    %s40 = sld [smem:[#allocation2]]
    %s41 = sld [smem:[#allocation2 + $0x1]]
    %s42 = sld [smem:[#allocation2 + $0x2]]
    %s43 = sld [smem:[#allocation2 + $0x3]]
    %s44 = sld [smem:[#allocation2 + $0x4]]
    %s45 = sld [smem:[#allocation2 + $0x5]]
    %s46 = sld [smem:[#allocation2 + $0x6]]
    %s47 = sld [smem:[#allocation2 + $0x7]]
    %s48 = sld [smem:[#allocation2 + $0x8]]
    %v49 = vstv %s40
    %v50 = vmul.f32 %v37, %v49
    %v51 = vstv %s42
    %v52 = vmul.f32 %v39, %v51
    %v53 = vadd.f32 %v50, %v52
    %v54 = vstv %s44
    %v55 = vadd.f32 %v53, %v54
    %v56 = vmul.f32 %v55, 0.5
    %v57 = vtanh.pop %v56
    %v58 = vadd.f32 %v57, 1.0
    %v59 = vmul.f32 %v58, 0.5
    %v60 = vstv %s41
    %v61 = vmul.f32 %v37, %v60
    %v62 = vstv %s43
    %v63 = vmul.f32 %v39, %v62
    %v64 = vadd.f32 %v61, %v63
    %v65 = vstv %s45
    %v66 = vadd.f32 %v64, %v65
    %v67 = vmul.f32 %v66, 0.5
    %v68 = vtanh.pop %v67
    %v69 = vadd.f32 %v68, 1.0
    %v70 = vmul.f32 %v69, 0.5
    %v71 = vstv %s46
    %v72 = vmul.f32 %v59, %v71
    %v73 = vstv %s47
    %v74 = vmul.f32 %v70, %v73
    %v75 = vadd.f32 %v72, %v74
    %v76 = vstv %s48
    %v77 = vadd.f32 %v75, %v76
    %v78 = vmul.f32 %v77, 0.5
    %v79 = vtanh.pop %v78
    %v80 = vadd.f32 %v79, 1.0
    %v81 = vmul.f32 %v80, 0.5
    %82 = vst [vmem:[#allocation7] sm:$0xff] %v81
    // Predicated region
    $region18: #{tpu_custom_call.1} parent=1 // pred_check
      _
    $region19: #{tpu_custom_call.1} parent=1 // pred_check_branch
      %84 = sbr.rel (0) target = $region21
    $region20: #{tpu_custom_call.1} parent=1 // pred_region
      %s86 = ssub.s32 128, 128
      %87 = vsyncadd [#allocation4], %s86
      %s89 = sshll.u32 [#allocation7], 4
      %s90 = int_to_ptr.vmem [resolvable:$true] %s89
      %92 = dma.vmem_to_hbm [thread:$0]  %s90, 128, %s2, [#allocation4]
    $region21: #{tpu_custom_call.1} parent=1 // pred_fallthru
      _
    // Predicated region
    $region22: #{tpu_custom_call.1} parent=1 // pred_check
      _
    $region23: #{tpu_custom_call.1} parent=1 // pred_check_branch
      %94 = sbr.rel (0) target = $region25
    $region24: #{tpu_custom_call.1} parent=1 // pred_region
      %95 = dma.done [#allocation4], 128
    $region25: #{tpu_custom_call.1} parent=1 // pred_fallthru
      _
    %96 = vsyncpa [#allocation3], 1
    %97 = vsyncpa [#allocation4], 1
    %98 = vsyncpa [#allocation5], 1

</llo_original>
